<compile_context>
chip_gen: v5e
topology: v5e:2x2
jax: 0.10.0
libtpu: 0.0.40
codegen_flags: <defaults>
</compile_context>

<pallas_src>
import functools

import jax
import jax.numpy as jnp
from jax import lax
from jax.experimental import pallas as pl
from jax.experimental.pallas import tpu as pltpu


def _round_up(x, m):
    return (x + m - 1) // m * m


def _conv1d_same_kernel(x_ref, w_ref, b_ref, o_ref, xbuf_ref, xt_ref, *,
                        nb, L, K, left, C_in, C_in_p, C_out, compute_dtype):
    """'same' conv1d for one batch block, lane/sublane-aligned throughout.

    x_ref:    (nb, C_in, L)          input block (original NCL layout)
    w_ref:    (C_out_p, K*C_in_p)    tap-folded, zero-padded weight
    b_ref:    (C_out_p, 1)           zero-padded bias, f32
    o_ref:    (nb, C_out, L)         output block
    xbuf_ref: (C_in_p, L_pad)        zero-padded input staging buffer (scratch)
    xt_ref:   (K*C_in_p, L_pad)      folded-tap MXU operand (scratch)
    """
    w = w_ref[...]
    b = b_ref[...]
    L_pad = xbuf_ref.shape[-1]

    # Zero the staging buffer once per grid step: its padded rows/columns
    # provide the conv's 'same' zero halo, and only [0:C_in, 0:L] is
    # overwritten below (correct under megacore sharding, no program_id gate).
    xbuf_ref[...] = jnp.zeros_like(xbuf_ref)

    for i in range(nb):
        xbuf_ref[0:C_in, 0:L] = x_ref[i].astype(compute_dtype)
        xv = xbuf_ref[...]                              # (C_in_p, L_pad)

        # Build the K shifted taps with XLU rotations. Because L_pad >= L+K-1
        # and the pad columns are zero, wrapped-around lanes are either zeros
        # (the 'same' halo) or land in columns >= L that are never stored, so
        # no masks are required.
        for k in range(K):
            shift = (left - k) % L_pad
            tap = pltpu.roll(xv, shift, axis=1) if shift else xv
            # Aligned, full-width store (k*C_in_p is a multiple of the
            # sublane packing by construction).
            xt_ref[k * C_in_p:(k + 1) * C_in_p, :] = tap

        # Single K-folded MXU matmul, f32 accumulation, bias in f32.
        acc = jnp.dot(w, xt_ref[...], preferred_element_type=jnp.float32)
        acc = acc + b                                   # (C_out_p, L_pad) f32
        o_ref[i] = acc[:C_out, :L].astype(o_ref.dtype)


def conv1d_bn_drop_forward(x_ncl, weight, bias, *, compute_dtype=None, nb=1):
    """Eval-mode forward of Conv1d_bn_drop: Conv1d with 'same' padding.

    x_ncl:  (N, C_in, L)   PyTorch NCL layout (kept as-is; no transposes).
    weight: (C_out, C_in, K)
    bias:   (C_out,)
    compute_dtype: MXU operand dtype. Defaults to x's dtype -- feed bf16 inputs
                   to halve the dominant HBM read; f32 keeps PyTorch parity.
    nb:     batch elements per grid step (N must be divisible by nb).
    Returns (N, C_out, L) in x's dtype.
    """
    N, C_in, L = x_ncl.shape
    C_out, C_in_w, K = weight.shape
    assert C_in_w == C_in
    assert N % nb == 0, "nb must divide the batch size"

    if compute_dtype is None:
        compute_dtype = x_ncl.dtype
    compute_dtype = jnp.dtype(compute_dtype)
    if compute_dtype not in (jnp.dtype(jnp.bfloat16), jnp.dtype(jnp.float32)):
        compute_dtype = jnp.dtype(jnp.float32)

    # Sublane packing of the compute dtype (f32: 8 rows/vreg, bf16: 16).
    sub = {4: 8, 2: 16}[compute_dtype.itemsize]
    C_in_p = _round_up(C_in, sub)
    C_out_p = _round_up(C_out, 8)

    # PyTorch padding='same' (stride=1, dilation=1): total = K-1, left=(K-1)//2.
    left = (K - 1) // 2
    # Lane-dense working width in VMEM; >= L + K - 1 so rotations never wrap
    # valid data into the stored region.
    L_pad = _round_up(L + K - 1, 128)

    # Fold taps into the weight: column k*C_in_p + c  ==  weight[o, c, k];
    # padded rows/columns are zero so they contribute nothing.
    w_t = jnp.transpose(weight, (0, 2, 1))                      # (C_out, K, C_in)
    w_t = jnp.pad(w_t, ((0, C_out_p - C_out), (0, 0), (0, C_in_p - C_in)))
    w_mat = w_t.reshape(C_out_p, K * C_in_p).astype(compute_dtype)
    b_col = jnp.pad(bias.astype(jnp.float32),
                    (0, C_out_p - C_out)).reshape(C_out_p, 1)

    kernel = functools.partial(
        _conv1d_same_kernel, nb=nb, L=L, K=K, left=left, C_in=C_in,
        C_in_p=C_in_p, C_out=C_out, compute_dtype=compute_dtype)

    return pl.pallas_call(
        kernel,
        out_shape=jax.ShapeDtypeStruct((N, C_out, L), x_ncl.dtype),
        grid_spec=pltpu.PrefetchScalarGridSpec(
            num_scalar_prefetch=0,
            grid=(N // nb,),
            in_specs=[
                pl.BlockSpec((nb, C_in, L), lambda n: (n, 0, 0)),
                # Constant index_maps: fetched once, never re-DMA'd.
                pl.BlockSpec((C_out_p, K * C_in_p), lambda n: (0, 0)),
                pl.BlockSpec((C_out_p, 1), lambda n: (0, 0)),
            ],
            out_specs=pl.BlockSpec((nb, C_out, L), lambda n: (n, 0, 0)),
            scratch_shapes=[
                pltpu.VMEM((C_in_p, L_pad), compute_dtype),       # staging
                pltpu.VMEM((K * C_in_p, L_pad), compute_dtype),   # folded taps
            ],
        ),
        compiler_params=pltpu.CompilerParams(
            dimension_semantics=("parallel",),
            # Conservative: fits every generation (v7x has 64 MiB physical).
            vmem_limit_bytes=32 * 1024 * 1024),
    )(x_ncl, w_mat, b_col)


if __name__ == "__main__":
    # Small shapes consistent with the module:
    # Conv1d(input_channle=4, channels=8, kernel_size=3), batch=2, seq=16.
    N, C_in, L = 2, 4, 16
    C_out, K = 8, 3

    key = jax.random.PRNGKey(0)
    kx, kw, kb = jax.random.split(key, 3)
    x = jax.random.normal(kx, (N, C_in, L), dtype=jnp.float32)
    bound = 1.0 / (C_in * K) ** 0.5
    weight = jax.random.uniform(kw, (C_out, C_in, K), jnp.float32, -bound, bound)
    bias = jax.random.uniform(kb, (C_out,), jnp.float32, -bound, bound)

    # f32 inputs -> f32 compute path (PyTorch-parity path). bf16 inputs would
    # take the bf16 MXU path automatically.
    out = conv1d_bn_drop_forward(x, weight, bias)
    out = jax.block_until_ready(out)

    # Pure-JAX reference: f32 'same' conv + bias.
    left = (K - 1) // 2
    right = (K - 1) - left
    ref = lax.conv_general_dilated(
        x, weight, window_strides=(1,), padding=[(left, right)],
        dimension_numbers=("NCH", "OIH", "NCH")) + bias[None, :, None]

    assert out.shape == (N, C_out, L)
    # Loose-ish tolerance: default TPU matmul precision may use reduced-
    # precision MXU passes for f32 operands (values here are O(1)).
    assert jnp.allclose(out, ref, atol=2e-2, rtol=2e-2), "mismatch vs reference"
    print("KERNEL_OK")
</pallas_src>

<mosaic_0001>
module attributes {stable_mosaic.version = 11 : i64} {
  func.func @_conv1d_same_kernel(%arg0: i32, %arg1: memref<1x4x16xf32, #tpu.memory_space<vmem>>, %arg2: memref<8x24xf32, #tpu.memory_space<vmem>>, %arg3: memref<8x1xf32, #tpu.memory_space<vmem>>, %arg4: memref<1x8x16xf32, #tpu.memory_space<vmem>>, %arg5: memref<8x128xf32, #tpu.memory_space<vmem>>, %arg6: memref<24x128xf32, #tpu.memory_space<vmem>>) attributes {dimension_semantics = [#tpu.dimension_semantics<parallel>], iteration_bounds = array<i64: 2>, scalar_prefetch = 0 : i64, scratch_operands = 2 : i64, tpu.core_type = #tpu.core_type<tc>, window_params = [{transform_indices = @transform_0, window_bounds = array<i64: 1, 4, 16>}, {pipeline_mode = #tpu.pipeline_mode<synchronous>, transform_indices = @transform_1, window_bounds = array<i64: 8, 24>}, {pipeline_mode = #tpu.pipeline_mode<synchronous>, transform_indices = @transform_2, window_bounds = array<i64: 8, 1>}, {transform_indices = @transform_3, window_bounds = array<i64: 1, 8, 16>}]} {
    %c0 = arith.constant 0 : index
    %c0_0 = arith.constant 0 : index
    %0 = vector.load %arg2[%c0, %c0_0] : memref<8x24xf32, #tpu.memory_space<vmem>>, vector<8x24xf32>
    %c0_1 = arith.constant 0 : index
    %c0_2 = arith.constant 0 : index
    %1 = vector.load %arg3[%c0_1, %c0_2] : memref<8x1xf32, #tpu.memory_space<vmem>>, vector<8x1xf32>
    %cst = arith.constant 0.000000e+00 : f32
    %2 = vector.broadcast %cst : f32 to vector<8x128xf32>
    %c0_3 = arith.constant 0 : index
    %c0_4 = arith.constant 0 : index
    %3 = vector.load %arg5[%c0_3, %c0_4] : memref<8x128xf32, #tpu.memory_space<vmem>>, vector<8x128xf32>
    tpu.vector_store %arg5[%c0_3, %c0_4], %2 {strides = array<i32>} : memref<8x128xf32, #tpu.memory_space<vmem>>, vector<8x128xf32>,
    %c0_5 = arith.constant 0 : index
    %c0_6 = arith.constant 0 : index
    %c0_7 = arith.constant 0 : index
    %4 = vector.load %arg1[%c0_5, %c0_6, %c0_7] : memref<1x4x16xf32, #tpu.memory_space<vmem>>, vector<1x4x16xf32>
    %5 = vector.shape_cast %4 : vector<1x4x16xf32> to vector<4x16xf32>
    %c0_8 = arith.constant 0 : index
    %c0_9 = arith.constant 0 : index
    %6 = vector.load %arg5[%c0_8, %c0_9] : memref<8x128xf32, #tpu.memory_space<vmem>>, vector<4x16xf32>
    tpu.vector_store %arg5[%c0_8, %c0_9], %5 {strides = array<i32>} : memref<8x128xf32, #tpu.memory_space<vmem>>, vector<4x16xf32>,
    %c0_10 = arith.constant 0 : index
    %c0_11 = arith.constant 0 : index
    %7 = vector.load %arg5[%c0_10, %c0_11] : memref<8x128xf32, #tpu.memory_space<vmem>>, vector<8x128xf32>
    %c1_i32 = arith.constant 1 : i32
    %8 = tpu.dynamic_rotate %7 by %c1_i32 dim 1 : vector<8x128xf32>, i32 -> vector<8x128xf32>
    %c0_12 = arith.constant 0 : index
    %c0_13 = arith.constant 0 : index
    %9 = vector.load %arg6[%c0_12, %c0_13] : memref<24x128xf32, #tpu.memory_space<vmem>>, vector<8x128xf32>
    tpu.vector_store %arg6[%c0_12, %c0_13], %8 {strides = array<i32>} : memref<24x128xf32, #tpu.memory_space<vmem>>, vector<8x128xf32>,
    %c8 = arith.constant 8 : index
    %c0_14 = arith.constant 0 : index
    %10 = vector.load %arg6[%c8, %c0_14] : memref<24x128xf32, #tpu.memory_space<vmem>>, vector<8x128xf32>
    tpu.vector_store %arg6[%c8, %c0_14], %7 {strides = array<i32>} : memref<24x128xf32, #tpu.memory_space<vmem>>, vector<8x128xf32>,
    %c127_i32 = arith.constant 127 : i32
    %11 = tpu.dynamic_rotate %7 by %c127_i32 dim 1 : vector<8x128xf32>, i32 -> vector<8x128xf32>
    %c16 = arith.constant 16 : index
    %c0_15 = arith.constant 0 : index
    %12 = vector.load %arg6[%c16, %c0_15] : memref<24x128xf32, #tpu.memory_space<vmem>>, vector<8x128xf32>
    tpu.vector_store %arg6[%c16, %c0_15], %11 {strides = array<i32>} : memref<24x128xf32, #tpu.memory_space<vmem>>, vector<8x128xf32>,
    %c0_16 = arith.constant 0 : index
    %c0_17 = arith.constant 0 : index
    %13 = vector.load %arg6[%c0_16, %c0_17] : memref<24x128xf32, #tpu.memory_space<vmem>>, vector<24x128xf32>
    %cst_18 = arith.constant dense<0.000000e+00> : vector<8x128xf32>
    %14 = tpu.matmul %0, %13, %cst_18 {dimension_numbers = #tpu.dot_dimension_numbers<[1], [0], [0], [1], [0, 0, 1, 1], [], []>} : vector<8x24xf32>, vector<24x128xf32>, vector<8x128xf32> -> vector<8x128xf32>
    %15 = vector.broadcast %1 : vector<8x1xf32> to vector<8x128xf32>
    %16 = arith.addf %14, %15 : vector<8x128xf32>
    %17 = vector.extract_strided_slice %16 {offsets = [0, 0], sizes = [8, 16], strides = [1, 1]} : vector<8x128xf32> to vector<8x16xf32>
    %c0_19 = arith.constant 0 : index
    %c0_20 = arith.constant 0 : index
    %c0_21 = arith.constant 0 : index
    %18 = vector.load %arg4[%c0_19, %c0_20, %c0_21] : memref<1x8x16xf32, #tpu.memory_space<vmem>>, vector<1x8x16xf32>
    %19 = vector.shape_cast %18 : vector<1x8x16xf32> to vector<8x16xf32>
    %20 = vector.shape_cast %17 : vector<8x16xf32> to vector<1x8x16xf32>
    tpu.vector_store %arg4[%c0_19, %c0_20, %c0_21], %20 {strides = array<i32>} : memref<1x8x16xf32, #tpu.memory_space<vmem>>, vector<1x8x16xf32>,
    return
  }
  func.func @transform_0(%arg0: i32) -> (i32, i32, i32) {
    %c0_i32 = arith.constant 0 : i32
    %c0_i32_0 = arith.constant 0 : i32
    %c0_i32_1 = arith.constant 0 : i32
    return %arg0, %c0_i32, %c0_i32_0 : i32, i32, i32
  }
  func.func @transform_1(%arg0: i32) -> (i32, i32) {
    %c0_i32 = arith.constant 0 : i32
    %c0_i32_0 = arith.constant 0 : i32
    %c0_i32_1 = arith.constant 0 : i32
    return %c0_i32, %c0_i32_0 : i32, i32
  }
  func.func @transform_2(%arg0: i32) -> (i32, i32) {
    %c0_i32 = arith.constant 0 : i32
    %c0_i32_0 = arith.constant 0 : i32
    %c0_i32_1 = arith.constant 0 : i32
    return %c0_i32, %c0_i32_0 : i32, i32
  }
  func.func @transform_3(%arg0: i32) -> (i32, i32, i32) {
    %c0_i32 = arith.constant 0 : i32
    %c0_i32_0 = arith.constant 0 : i32
    %c0_i32_1 = arith.constant 0 : i32
    return %arg0, %c0_i32, %c0_i32_0 : i32, i32, i32
  }
}

</mosaic_0001>

<llo_original>
// kernel: tpu_custom_call.1
$region0: #{tpu_custom_call.1}
  #allocation0 [shape = 'u32[]', space=smem, size = 0x4, offset = 0x4, fixed_abs, tag = 'smem constant byte address 0x4 - core index']
  #allocation1 [shape = 'u32[72,128]{1,0:T(1,128)}', space=vmem, size = 0x9000, scoped, tag = 'internal scratch']
  #allocation2 [shape = 'f32[8,128]{1,0:T(8,128)}', space=vmem, size = 0x1000, scoped, tag = 'scratch operand']
  #allocation3 [shape = 'f32[24,128]{1,0:T(8,128)}', space=vmem, size = 0x3000, scoped, tag = 'scratch operand']
  %s0 = inlined_call_operand.vmem [shape: f32[2,4,16], index: 0, kind: input, shape index: {}]
  %s1 = inlined_call_operand.hbm [shape: f32[8,24], index: 1, kind: input, shape index: {}]
  %s2 = inlined_call_operand.vmem [shape: f32[8,1], index: 2, kind: input, shape index: {}]
  %s3 = inlined_call_operand.hbm [shape: f32[2,8,16], index: 3, kind: output, shape index: {}]
  %s4 = sld [smem:[#allocation0]]
  $region49: #{tpu_custom_call.1} parent=0
    _
  %s6 = ssub.s32 1, %s4
  %s7 = scalar_select 0, %s6, %s4
  $region1: #{tpu_custom_call.1} parent=0
    #allocation4 [shape = 'u8[4096]{0}', space=vmem, size = 0x1000, scoped, tag = 'input window, operand 1, single buffered']
    #allocation5 [shape = 's32[2]{0}', space=sflag, size = 0x8, scoped, tag = 'scoped memory for tpu_custom_call.1']
    #allocation6 [shape = 's32[2]{0}', space=sflag, size = 0x8, scoped, tag = 'scoped memory for tpu_custom_call.1']
    #allocation7 [shape = 'u8[8192]{0}', space=vmem, size = 0x2000, scoped, tag = 'output window, operand 0']
    %8 = vsyncpa [#allocation5], 0
    %9 = vsyncpa [#allocation6], 0
    %s10 = scalar_lea.sflag [#allocation6], 1
    %11 = vsyncpa %s10, 0
    loop: start=0, step=1, limit=4
    $region2: #{tpu_custom_call.1} parent=1 // loop_pre_header
      _
    $region3: #{tpu_custom_call.1} parent=1 // loop_header
      %s13 = sphi 0, %s17
      %p14 = scmp.ge.s32.totalorder %s13, 4
      %s23 = sphi 0, %s25
      %s26 = sphi 0, %s23
      %s27 = sphi 0, %s26
      %s43 = sphi 0, %s27
      %s47 = sphi 0, %s47
      %s49 = sphi 0, %s47
      %s50 = sphi 0, %s49
      %s64 = sphi 0, %s50
      %s68 = sphi 0, %s68
      %s70 = sphi 0, %s68
      %s71 = sphi 0, %s70
      %s85 = sphi 0, %s71
      %s91 = sphi 0, %s93
      %s94 = sphi 0, %s91
      %s95 = sphi 0, %s94
      %s111 = sphi 0, %s95
    $region4: #{tpu_custom_call.1} parent=1 // loop_header_branch
      %16 = sbr.rel (%p14) target = $region8
    $region5: #{tpu_custom_call.1} parent=1 // loop_body
      %s18 = ssub.s32 %s13, 1
      %s19 = ssub.s32 %s13, 2
      %s20 = sadd.s32 %s13, 1
      %s21 = ssub.s32 %s13, %s20
      %p22 = scmp.eq.s32.totalorder %s21, 0
      %s24 = sadd.s32 %s23, 1
      %s25 = scalar_select %p22, %s23, %s24
      %p28 = pneg %p22
      %p29 = scmp.eq.s32.totalorder %s13, 1
      %p30 = por %p28, %p29
      %p31 = scmp.ne.s32.totalorder %s23, %s26
      %p32 = scmp.eq.s32.totalorder %s13, 0
      %p33 = por %p31, %p32
      %p34 = scmp.ne.s32.totalorder %s23, %s26
      %p35 = scmp.eq.s32.totalorder %s18, 1
      %p36 = por %p34, %p35
      %p37 = scmp.ne.s32.totalorder %s26, %s27
      %p38 = scmp.eq.s32.totalorder %s18, 0
      %p39 = por %p37, %p38
      %p40 = scmp.ne.s32.totalorder %s26, %s27
      %p41 = scmp.eq.s32.totalorder %s19, 1
      %p42 = por %p40, %p41
      %p44 = scmp.ne.s32.totalorder %s27, %s43
      %p45 = scmp.eq.s32.totalorder %s19, 0
      %p46 = por %p44, %p45
      %s48 = sadd.s32 %s47, 1
      %p51 = scmp.eq.s32.totalorder %s13, 1
      %p52 = scmp.ne.s32.totalorder %s47, %s49
      %p53 = scmp.eq.s32.totalorder %s13, 0
      %p54 = por %p52, %p53
      %p55 = scmp.ne.s32.totalorder %s47, %s49
      %p56 = scmp.eq.s32.totalorder %s18, 1
      %p57 = por %p55, %p56
      %p58 = scmp.ne.s32.totalorder %s49, %s50
      %p59 = scmp.eq.s32.totalorder %s18, 0
      %p60 = por %p58, %p59
      %p61 = scmp.ne.s32.totalorder %s49, %s50
      %p62 = scmp.eq.s32.totalorder %s19, 1
      %p63 = por %p61, %p62
      %p65 = scmp.ne.s32.totalorder %s50, %s64
      %p66 = scmp.eq.s32.totalorder %s19, 0
      %p67 = por %p65, %p66
      %s69 = sadd.s32 %s68, 1
      %p72 = scmp.eq.s32.totalorder %s13, 1
      %p73 = scmp.ne.s32.totalorder %s68, %s70
      %p74 = scmp.eq.s32.totalorder %s13, 0
      %p75 = por %p73, %p74
      %p76 = scmp.ne.s32.totalorder %s68, %s70
      %p77 = scmp.eq.s32.totalorder %s18, 1
      %p78 = por %p76, %p77
      %p79 = scmp.ne.s32.totalorder %s70, %s71
      %p80 = scmp.eq.s32.totalorder %s18, 0
      %p81 = por %p79, %p80
      %p82 = scmp.ne.s32.totalorder %s70, %s71
      %p83 = scmp.eq.s32.totalorder %s19, 1
      %p84 = por %p82, %p83
      %p86 = scmp.ne.s32.totalorder %s71, %s85
      %p87 = scmp.eq.s32.totalorder %s19, 0
      %p88 = por %p86, %p87
      %s89 = ssub.s32 %s13, %s20
      %p90 = scmp.eq.s32.totalorder %s89, 0
      %s92 = sadd.s32 %s91, 1
      %s93 = scalar_select %p90, %s91, %s92
      %p96 = pneg %p90
      %p97 = scmp.eq.s32.totalorder %s13, 1
      %p98 = por %p96, %p97
      %p99 = scmp.ne.s32.totalorder %s91, %s94
      %p100 = scmp.eq.s32.totalorder %s13, 0
      %p101 = por %p99, %p100
      %p102 = scmp.ne.s32.totalorder %s91, %s94
      %p103 = scmp.eq.s32.totalorder %s18, 1
      %p104 = por %p102, %p103
      %p105 = scmp.ne.s32.totalorder %s94, %s95
      %p106 = scmp.eq.s32.totalorder %s18, 0
      %p107 = por %p105, %p106
      %p108 = scmp.ne.s32.totalorder %s94, %s95
      %p109 = scmp.eq.s32.totalorder %s19, 1
      %p110 = por %p108, %p109
      %p112 = scmp.ne.s32.totalorder %s95, %s111
      %p113 = scmp.eq.s32.totalorder %s19, 0
      %p114 = por %p112, %p113
      %p115 = scmp.le.s32.totalorder 1, %s13
      %p116 = scmp.lt.s32.totalorder %s13, 3
      %p117 = pnand %p115, %p116
      %p118 = pneg %p117
      // Predicated region
      $region9: #{tpu_custom_call.1} parent=5 // pred_check
        _
      $region10: #{tpu_custom_call.1} parent=5 // pred_check_branch
        %120 = sbr.rel (%p117) target = $region12
      $region11: #{tpu_custom_call.1} parent=5 // pred_region
        %s121 = ssub.s32 %s13, 1
        // Predicated region
        $region13: #{tpu_custom_call.1} parent=11 // pred_check
          %p122 = pneg %p60
        $region14: #{tpu_custom_call.1} parent=11 // pred_check_branch
          %124 = sbr.rel (%p122) target = $region16
        $region15: #{tpu_custom_call.1} parent=11 // pred_region
          %126 = vsyncadd [#allocation5], 0
          %s128 = sshll.u32 %s1, 4
          %s129 = int_to_ptr.hbm [resolvable:$true] %s128
          %s130 = sshll.u32 [#allocation4], 4
          %s131 = int_to_ptr.vmem [resolvable:$true] %s130
          %133 = dma.hbm_to_vmem [thread:$0]  %s129, 128, %s131, [#allocation5]
        $region16: #{tpu_custom_call.1} parent=11 // pred_fallthru
          _
        // Predicated region
        $region17: #{tpu_custom_call.1} parent=11 // pred_check
          %p134 = pneg %p81
        $region18: #{tpu_custom_call.1} parent=11 // pred_check_branch
          %136 = sbr.rel (%p134) target = $region20
        $region19: #{tpu_custom_call.1} parent=11 // pred_region
          _
        $region20: #{tpu_custom_call.1} parent=11 // pred_fallthru
          _
      $region12: #{tpu_custom_call.1} parent=5 // pred_fallthru
        _
      %p137 = scmp.lt.s32.totalorder %s13, 2
      // Predicated region
      $region21: #{tpu_custom_call.1} parent=5 // pred_check
        %p138 = pneg %p137
      $region22: #{tpu_custom_call.1} parent=5 // pred_check_branch
        %140 = sbr.rel (%p138) target = $region24
      $region23: #{tpu_custom_call.1} parent=5 // pred_region
        // Predicated region
        $region25: #{tpu_custom_call.1} parent=23 // pred_check
          %p141 = pneg %p33
        $region26: #{tpu_custom_call.1} parent=23 // pred_check_branch
          %143 = sbr.rel (%p141) target = $region28
        $region27: #{tpu_custom_call.1} parent=23 // pred_region
          %p144 = scmp.lt.s32.totalorder %s13, 1
          %s145 = scalar_select %p144, %s13, 1
          %s146 = smul.addr %s145, 4
          %s147 = scalar_lea.vmem %s0, %s146
        $region28: #{tpu_custom_call.1} parent=23 // pred_fallthru
          _
      $region24: #{tpu_custom_call.1} parent=5 // pred_fallthru
        _
      %p148 = scmp.le.s32.totalorder 1, %s13
      %p149 = scmp.lt.s32.totalorder %s13, 3
      %p150 = pnand %p148, %p149
      %p151 = pneg %p150
      // Predicated region
      $region29: #{tpu_custom_call.1} parent=5 // pred_check
        _
      $region30: #{tpu_custom_call.1} parent=5 // pred_check_branch
        %153 = sbr.rel (%p150) target = $region32
      $region31: #{tpu_custom_call.1} parent=5 // pred_region
        %s154 = ssub.s32 %s13, 1
        // Predicated region
        $region33: #{tpu_custom_call.1} parent=31 // pred_check
          %p155 = pneg %p60
        $region34: #{tpu_custom_call.1} parent=31 // pred_check_branch
          %157 = sbr.rel (%p155) target = $region36
        $region35: #{tpu_custom_call.1} parent=31 // pred_region
          %159 = dma.done [#allocation5], 128
        $region36: #{tpu_custom_call.1} parent=31 // pred_fallthru
          _
        %p160 = scmp.lt.s32.totalorder %s18, 1
        %s161 = scalar_select %p160, %s18, 1
        %s162 = smul.addr %s161, 4
        %s163 = scalar_lea.vmem %s0, %s162
        %p164 = pneg %p39
        %p165 = pneg %p36
        %p166 = pneg %p60
        %p167 = pneg %p57
        %p168 = pneg %p81
        %p169 = pneg %p78
        %p170 = pneg %p107
        %p171 = pneg %p104
        %s172 = sand.u32 %s94, 1
        %s173 = scalar_lea.sflag [#allocation6], %s172
        %s174 = sand.u32 %s94, 1
        %s175 = smul.addr %s174, 8
        %s176 = scalar_lea.vmem [#allocation7], %s175
        %p177 = scmp.lt.s32.totalorder %s18, 1
        %s178 = scalar_select %p177, %s18, 1
        %s179 = smul.addr %s178, 4
        %s180 = scalar_lea.vmem %s0, %s179
        %v181 = vld [vmem:[#allocation4] sm:$0xff]
        %v182 = vld [vmem:[%s2] sm:$0xff]
        %183 = vst [vmem:[#allocation2] sm:$0xff] 0.0
        %v184 = vld [vmem:[%s180] sm:$0xf]
        %vm185 = vcmask 125952
        %186 = vst.msk [vmem:[#allocation2] sm:$0xf] %vm185, %v184
        %v187 = vld [vmem:[#allocation2] sm:$0xff]
        %188 = vrot.lane.b32.xlu0 %v187, 1
        %v189 = vpop.permute.xlu0 %188
        %190 = vst [vmem:[#allocation3] sm:$0xff] %v189
        %191 = vst [vmem:[#allocation3 + $0x8] sm:$0xff] %v187
        %192 = vrot.lane.b32.xlu0 %v187, 127
        %v193 = vpop.permute.xlu0 %192
        %194 = vst [vmem:[#allocation3 + $0x10] sm:$0xff] %v193
        %v195 = vld [vmem:[#allocation3] sm:$0xff]
        %v196 = vld [vmem:[#allocation3 + $0x8] sm:$0xff]
        %v197 = vld [vmem:[#allocation3 + $0x10] sm:$0xff]
        %199 = vset.pattern.permute.xlu0 0
        %200 = vperm.xlu0 %199, %v182
        %v201 = vpop.permute.xlu0 %200
        %vm203 = vcmask 195584
        %v205 = vsel %vm203, %v181, 0
        %207 = vmatpush.msra.mxu0 0.0
        %208 = vmatpush.msra.mxu0 0.0
        %209 = vmatpush.msra.mxu0 0.0
        %210 = vmatpush.msra.mxu0 0.0
        %211 = vmatpush.msra.mxu0 0.0
        %212 = vmatpush.msra.mxu0 0.0
        %213 = vmatpush.msra.mxu0 0.0
        %214 = vmatpush.msra.mxu0 0.0
        %215 = vmatpush.msra.mxu0 0.0
        %216 = vmatpush.msra.mxu0 0.0
        %217 = vmatpush.msra.mxu0 0.0
        %218 = vmatpush.msra.mxu0 0.0
        %219 = vmatpush.msra.mxu0 0.0
        %220 = vmatpush.msra.mxu0 %v197
        %221 = vmatpush.msra.mxu0 %v196
        %222 = vmatpush.msra.mxu0 %v195
        %223 = vmatmul.f32.gmra.mxu0 %v205
        %v224 = vpop.f32.mrf.mxu0
        %v225 = vadd.f32 %v201, %v224
        %226 = vdwg.mxu0
        %vm227 = vcmask 130048
        %228 = vst.msk [vmem:[%s176] sm:$0xff] %vm227, %v225
        %s229 = sand.u32 %s94, 1
        %s230 = scalar_lea.sflag [#allocation6], %s229
        %s231 = sand.u32 %s94, 1
        %s232 = smul.addr %s231, 8
        %s233 = scalar_lea.vmem [#allocation7], %s232
        // Predicated region
        $region37: #{tpu_custom_call.1} parent=31 // pred_check
          %p234 = pneg %p104
        $region38: #{tpu_custom_call.1} parent=31 // pred_check_branch
          %236 = sbr.rel (%p234) target = $region40
        $region39: #{tpu_custom_call.1} parent=31 // pred_region
          %238 = vsyncadd %s230, 0
          %s239 = smul.addr %s18, 8
          %s240 = scalar_lea.hbm %s3, %s239
          %s242 = sshll.u32 %s233, 4
          %s243 = int_to_ptr.vmem [resolvable:$true] %s242
          %s244 = sshll.u32 %s240, 4
          %s245 = int_to_ptr.hbm [resolvable:$true] %s244
          %247 = dma.vmem_to_hbm [thread:$0]  %s243, 128, %s245, %s230
        $region40: #{tpu_custom_call.1} parent=31 // pred_fallthru
          _
      $region32: #{tpu_custom_call.1} parent=5 // pred_fallthru
        _
      %p248 = scmp.le.s32.totalorder 2, %s13
      // Predicated region
      $region41: #{tpu_custom_call.1} parent=5 // pred_check
        %p249 = pneg %p248
      $region42: #{tpu_custom_call.1} parent=5 // pred_check_branch
        %251 = sbr.rel (%p249) target = $region44
      $region43: #{tpu_custom_call.1} parent=5 // pred_region
        %s252 = ssub.s32 %s13, 2
        // Predicated region
        $region45: #{tpu_custom_call.1} parent=43 // pred_check
          %p253 = pneg %p110
        $region46: #{tpu_custom_call.1} parent=43 // pred_check_branch
          %255 = sbr.rel (%p253) target = $region48
        $region47: #{tpu_custom_call.1} parent=43 // pred_region
          %s256 = sand.u32 %s95, 1
          %s257 = scalar_lea.sflag [#allocation6], %s256
          %s258 = sand.u32 %s95, 1
          %s259 = smul.addr %s258, 8
          %s260 = scalar_lea.vmem [#allocation7], %s259
          %262 = dma.done %s257, 128
        $region48: #{tpu_custom_call.1} parent=43 // pred_fallthru
          _
      $region44: #{tpu_custom_call.1} parent=5 // pred_fallthru
        _
    $region6: #{tpu_custom_call.1} parent=1 // loop_footer
      %s17 = sadd.s32 1, %s13
    $region7: #{tpu_custom_call.1} parent=1 // loop_footer_branch
      %12 = sbr.rel target = $region3
    $region8: #{tpu_custom_call.1} parent=1 // loop_exit
      _
    %263 = vsyncpa [#allocation5], 1
    %s264 = scalar_lea.sflag [#allocation5], 1
    %265 = vsyncpa %s264, 1
    %266 = vsyncpa [#allocation6], 1
    %s267 = scalar_lea.sflag [#allocation6], 1
    %268 = vsyncpa %s267, 1

</llo_original>
